<compile_context>
chip_gen: v7x
topology: tpu7x:2x2x1
jax: 0.10.0
libtpu: 0.0.40
codegen_flags: <defaults>
</compile_context>

<pallas_src>
import numpy as np
import jax
import jax.numpy as jnp
from jax.experimental import pallas as pl
from jax.experimental.pallas import tpu as pltpu


def _round_up(x, m):
    return ((x + m - 1) // m) * m


def _made_masks(features: int, hidden: int, mult: int):
    """Standard MADE masks. Output layout is [scale block (D) | shift block (D)]."""
    in_deg = np.arange(1, features + 1)                              # 1..D
    hid_deg = (np.arange(hidden) % max(1, features - 1)) + 1         # 1..D-1 cycled
    out_deg = np.tile(in_deg, mult)                                  # degrees for 2*D outputs
    m1 = (hid_deg[:, None] >= in_deg[None, :]).astype(np.float32)    # [H, D]
    m2 = (out_deg[:, None] > hid_deg[None, :]).astype(np.float32)    # [2D, H]  (strict)
    return jnp.asarray(m1), jnp.asarray(m2)


def _make_kernel(d_real: int, d_pad: int):
    """Kernel for one batch tile: MADE MLP + affine transform + logabsdet."""

    def kernel(x_ref, w1_ref, hb_ref, w2_ref, b2_ref, out_ref, lad_ref):
        x = x_ref[...]                                               # [tb, Dp] f32

        # Hidden layer (constant-context matmul already folded into hb):
        # h = relu(x W1 + hb).  bf16 operands, f32 accumulation.
        h = jnp.maximum(
            jnp.dot(x.astype(w1_ref.dtype), w1_ref[...],
                    preferred_element_type=jnp.float32) + hb_ref[...],
            0.0)                                                     # [tb, Hp] f32

        # Fused output heads: single [Hp, 2*Dp] matmul, lane-aligned static split.
        p = jnp.dot(h.astype(w2_ref.dtype), w2_ref[...],
                    preferred_element_type=jnp.float32) + b2_ref[...]  # [tb, 2*Dp] f32
        us = p[:, :d_pad]                                            # unconstrained scale
        t = p[:, d_pad:]                                             # shift

        # Elementwise forward (affine), all in f32 (v5e VPU/EUP have no bf16).
        scale = jax.nn.sigmoid(us + 2.0) + 1e-3                      # [tb, Dp]
        out_ref[...] = (scale * x + t).astype(out_ref.dtype)

        # logabsdet over the real feature lanes only (padded lanes masked out),
        # emitted lane-dense as a (1, tb) row.
        lane = jax.lax.broadcasted_iota(jnp.int32, (1, d_pad), 1)
        log_s = jnp.where(lane < d_real, jnp.log(scale), 0.0)        # [tb, Dp]
        lad_ref[...] = jnp.sum(log_s, axis=-1)[None, :]              # [1, tb]

    return kernel


def init_params(key, features, hidden, context_features):
    k = jax.random.split(key, 6)
    scale = 0.1
    m1, m2 = _made_masks(features, hidden, mult=2)
    return {
        "context": scale * jax.random.normal(k[0], (context_features,), jnp.float32),
        "w1": scale * jax.random.normal(k[1], (hidden, features), jnp.float32),      # [H, D]
        "wc": scale * jax.random.normal(k[2], (hidden, context_features), jnp.float32),
        "b1": scale * jax.random.normal(k[3], (hidden,), jnp.float32),
        "w2": scale * jax.random.normal(k[4], (2 * features, hidden), jnp.float32),   # [2D, H]
        "b2": scale * jax.random.normal(k[5], (2 * features,), jnp.float32),
        "m1": m1,
        "m2": m2,
    }


def prepare_kernel_params(params, weight_dtype=jnp.bfloat16):
    """One-time (per weight update) prep: mask, fold context, transpose, pad, cast.

    * D and H are zero-padded to multiples of 128 so every matmul tile and DMA
      row is dense (padding is numerically a no-op).
    * The two MADE output heads are fused into one [Hp, 2*Dp] weight with the
      scale head in lanes [0, Dp) and the shift head in lanes [Dp, 2*Dp).
    * Matmul weights are cast to bf16 (MXU-native on v5e/v6e/v7x); biases stay f32.
    """
    H, D = params["m1"].shape
    Dp, Hp = _round_up(D, 128), _round_up(H, 128)

    w1 = (params["w1"] * params["m1"]).T                             # [D, H]
    w2 = (params["w2"] * params["m2"]).T                             # [H, 2D]
    # Fold the constant-context matmul into the hidden bias: Wc @ c + b1.
    hbias = params["wc"] @ params["context"] + params["b1"]          # [H]

    w1t = jnp.zeros((Dp, Hp), jnp.float32).at[:D, :H].set(w1)
    w2c = (jnp.zeros((Hp, 2 * Dp), jnp.float32)
           .at[:H, :D].set(w2[:, :D])                                # scale head
           .at[:H, Dp:Dp + D].set(w2[:, D:]))                        # shift head
    b2c = (jnp.zeros((1, 2 * Dp), jnp.float32)
           .at[0, :D].set(params["b2"][:D])
           .at[0, Dp:Dp + D].set(params["b2"][D:]))
    hb = jnp.zeros((1, Hp), jnp.float32).at[0, :H].set(hbias)

    return {
        "w1t": w1t.astype(weight_dtype),                             # [Dp, Hp]
        "hbias": hb,                                                 # [1, Hp]  f32
        "w2": w2c.astype(weight_dtype),                              # [Hp, 2*Dp]
        "b2": b2c,                                                   # [1, 2*Dp] f32
        "d_real": D,
    }


def autoregressive_forward(inputs, prepared, *, tb_cap=512):
    """inputs: [B, D] float32 -> (outputs [B, D], logabsdet [B])."""
    B, D = inputs.shape
    assert prepared["d_real"] == D
    Dp, Hp = prepared["w1t"].shape

    # Pad features to the 128-lane-aligned width used by the prepared weights.
    x_p = inputs if Dp == D else jnp.pad(inputs, ((0, 0), (0, Dp - D)))

    # Batch tile: full batch for small B, otherwise a 128-aligned cap (bigger
    # tiles amortize per-grid-step overhead; x/out are the only streamed data).
    tb = B if B <= tb_cap else tb_cap
    grid = (pl.cdiv(B, tb),)

    # VMEM budget from actual tile sizes (worst case: double-buffered weights),
    # with margin; clamped so it is sane on v7x (64 MiB) and v5e/v6e (128 MiB).
    wbytes = sum(int(prepared[k].size) * prepared[k].dtype.itemsize
                 for k in ("w1t", "hbias", "w2", "b2"))
    stream = 2 * (2 * tb * Dp * 4 + tb * 4)                          # x + out + lad, dbl-buffered
    need = 2 * wbytes + stream
    vmem_limit = int(min(max(2 * need, 32 * 1024 * 1024), 96 * 1024 * 1024))

    batch_map = lambda i: (i, 0)
    const_map = lambda i: (0, 0)
    lad_map = lambda i: (0, i)

    def build(single_buffer_weights):
        if single_buffer_weights:
            wspec = lambda shape: pl.BlockSpec(shape, const_map,
                                               pipeline_mode=pl.Buffered(1))
        else:
            wspec = lambda shape: pl.BlockSpec(shape, const_map)
        return pl.pallas_call(
            _make_kernel(D, Dp),
            out_shape=(jax.ShapeDtypeStruct((B, Dp), inputs.dtype),
                       jax.ShapeDtypeStruct((1, B), jnp.float32)),
            grid_spec=pltpu.PrefetchScalarGridSpec(
                num_scalar_prefetch=0,
                grid=grid,
                in_specs=[
                    pl.BlockSpec((tb, Dp), batch_map),               # x (streamed)
                    wspec((Dp, Hp)),                                 # w1t   (VMEM-resident, bf16)
                    wspec((1, Hp)),                                  # hbias (f32)
                    wspec((Hp, 2 * Dp)),                             # fused [scale|shift] head
                    wspec((1, 2 * Dp)),                              # fused bias
                ],
                out_specs=(
                    pl.BlockSpec((tb, Dp), batch_map),               # outputs
                    pl.BlockSpec((1, tb), lad_map),                  # logabsdet (lane-dense)
                ),
            ),
            compiler_params=pltpu.CompilerParams(
                dimension_semantics=("parallel",),                   # shard batch across TCs
                vmem_limit_bytes=vmem_limit,
            ),
        )

    args = (x_p, prepared["w1t"], prepared["hbias"], prepared["w2"], prepared["b2"])
    try:
        out_p, lad = build(True)(*args)
    except Exception:
        # pipeline_mode=pl.Buffered(1) unsupported on this jax version/backend:
        # fall back to default (double-buffered) resident weights.
        out_p, lad = build(False)(*args)

    return out_p[:, :D], lad[0, :]


def _reference_forward(inputs, params):
    """Pure-JAX f32 reference mirroring the PyTorch semantics, for verification."""
    B, D = inputs.shape
    ctx = jnp.broadcast_to(params["context"][None, :], (B, params["context"].shape[0]))
    h = jnp.maximum(inputs @ (params["w1"] * params["m1"]).T
                    + ctx @ params["wc"].T + params["b1"], 0.0)
    p = h @ (params["w2"] * params["m2"]).T + params["b2"]
    us, shift = p[:, :D], p[:, D:]
    scale = jax.nn.sigmoid(us + 2.0) + 1e-3
    return scale * inputs + shift, jnp.sum(jnp.log(scale), axis=-1)


if __name__ == "__main__":
    B, D, H, C = 8, 16, 32, 8
    key = jax.random.PRNGKey(0)
    kx, kp = jax.random.split(key)
    x = jax.random.normal(kx, (B, D), jnp.float32)
    params = init_params(kp, features=D, hidden=H, context_features=C)
    prepared = prepare_kernel_params(params)                         # bf16 weights

    outputs, logabsdet = jax.block_until_ready(autoregressive_forward(x, prepared))

    ref_out, ref_lad = _reference_forward(x, params)
    assert outputs.shape == (B, D) and logabsdet.shape == (B,)
    # Tolerance relaxed vs. the pure-f32 reference because matmul weights are bf16
    # (f32 accumulation); low-order bits differ.
    assert jnp.allclose(outputs, ref_out, atol=5e-2, rtol=5e-2)
    assert jnp.allclose(logabsdet, ref_lad, atol=5e-2, rtol=5e-2)

    print("KERNEL_OK")
</pallas_src>

<mosaic_0001>
module attributes {stable_mosaic.version = 11 : i64} {
  func.func @kernel(%arg0: i32, %arg1: memref<8x128xf32, #tpu.memory_space<vmem>>, %arg2: memref<128x128xbf16, #tpu.memory_space<vmem>>, %arg3: memref<1x128xf32, #tpu.memory_space<vmem>>, %arg4: memref<128x256xbf16, #tpu.memory_space<vmem>>, %arg5: memref<1x256xf32, #tpu.memory_space<vmem>>, %arg6: memref<8x128xf32, #tpu.memory_space<vmem>>, %arg7: memref<1x8xf32, #tpu.memory_space<vmem>>) attributes {dimension_semantics = [#tpu.dimension_semantics<parallel>], iteration_bounds = array<i64: 1>, scalar_prefetch = 0 : i64, scratch_operands = 0 : i64, tpu.core_type = #tpu.core_type<tc>, window_params = [{transform_indices = @transform_0, window_bounds = array<i64: 8, 128>}, {pipeline_mode = #tpu.pipeline_mode<synchronous>, transform_indices = @transform_1, window_bounds = array<i64: 128, 128>}, {pipeline_mode = #tpu.pipeline_mode<synchronous>, transform_indices = @transform_2, window_bounds = array<i64: 1, 128>}, {pipeline_mode = #tpu.pipeline_mode<synchronous>, transform_indices = @transform_3, window_bounds = array<i64: 128, 256>}, {pipeline_mode = #tpu.pipeline_mode<synchronous>, transform_indices = @transform_4, window_bounds = array<i64: 1, 256>}, {transform_indices = @transform_5, window_bounds = array<i64: 8, 128>}, {transform_indices = @transform_6, window_bounds = array<i64: 1, 8>}]} {
    %c0 = arith.constant 0 : index
    %c0_0 = arith.constant 0 : index
    %0 = vector.load %arg1[%c0, %c0_0] : memref<8x128xf32, #tpu.memory_space<vmem>>, vector<8x128xf32>
    %1 = arith.truncf %0 : vector<8x128xf32> to vector<8x128xbf16>
    %c0_1 = arith.constant 0 : index
    %c0_2 = arith.constant 0 : index
    %2 = vector.load %arg2[%c0_1, %c0_2] : memref<128x128xbf16, #tpu.memory_space<vmem>>, vector<128x128xbf16>
    %cst = arith.constant dense<0.000000e+00> : vector<8x128xf32>
    %3 = tpu.matmul %1, %2, %cst {dimension_numbers = #tpu.dot_dimension_numbers<[1], [0], [0], [1], [0, 0, 1, 1], [], []>} : vector<8x128xbf16>, vector<128x128xbf16>, vector<8x128xf32> -> vector<8x128xf32>
    %c0_3 = arith.constant 0 : index
    %c0_4 = arith.constant 0 : index
    %4 = vector.load %arg3[%c0_3, %c0_4] : memref<1x128xf32, #tpu.memory_space<vmem>>, vector<1x128xf32>
    %5 = vector.broadcast %4 : vector<1x128xf32> to vector<8x128xf32>
    %6 = arith.addf %3, %5 : vector<8x128xf32>
    %cst_5 = arith.constant 0.000000e+00 : f32
    %7 = vector.broadcast %cst_5 : f32 to vector<8x128xf32>
    %8 = arith.maximumf %6, %7 : vector<8x128xf32>
    %9 = arith.truncf %8 : vector<8x128xf32> to vector<8x128xbf16>
    %c0_6 = arith.constant 0 : index
    %c0_7 = arith.constant 0 : index
    %10 = vector.load %arg4[%c0_6, %c0_7] : memref<128x256xbf16, #tpu.memory_space<vmem>>, vector<128x256xbf16>
    %cst_8 = arith.constant dense<0.000000e+00> : vector<8x256xf32>
    %11 = tpu.matmul %9, %10, %cst_8 {dimension_numbers = #tpu.dot_dimension_numbers<[1], [0], [0], [1], [0, 0, 1, 1], [], []>} : vector<8x128xbf16>, vector<128x256xbf16>, vector<8x256xf32> -> vector<8x256xf32>
    %c0_9 = arith.constant 0 : index
    %c0_10 = arith.constant 0 : index
    %12 = vector.load %arg5[%c0_9, %c0_10] : memref<1x256xf32, #tpu.memory_space<vmem>>, vector<1x256xf32>
    %13 = vector.broadcast %12 : vector<1x256xf32> to vector<8x256xf32>
    %14 = arith.addf %11, %13 : vector<8x256xf32>
    %15 = vector.extract_strided_slice %14 {offsets = [0, 0], sizes = [8, 128], strides = [1, 1]} : vector<8x256xf32> to vector<8x128xf32>
    %16 = vector.extract_strided_slice %14 {offsets = [0, 128], sizes = [8, 128], strides = [1, 1]} : vector<8x256xf32> to vector<8x128xf32>
    %cst_11 = arith.constant 2.000000e+00 : f32
    %17 = vector.broadcast %cst_11 : f32 to vector<8x128xf32>
    %18 = arith.addf %15, %17 : vector<8x128xf32>
    %19 = arith.negf %18 : vector<8x128xf32>
    %20 = math.exp %19 : vector<8x128xf32>
    %cst_12 = arith.constant 1.000000e+00 : f32
    %21 = vector.broadcast %cst_12 : f32 to vector<8x128xf32>
    %22 = arith.addf %21, %20 : vector<8x128xf32>
    %23 = arith.divf %21, %22 : vector<8x128xf32>
    %cst_13 = arith.constant 1.000000e-03 : f32
    %24 = vector.broadcast %cst_13 : f32 to vector<8x128xf32>
    %25 = arith.addf %23, %24 : vector<8x128xf32>
    %26 = arith.mulf %25, %0 : vector<8x128xf32>
    %27 = arith.addf %26, %16 : vector<8x128xf32>
    %c0_14 = arith.constant 0 : index
    %c0_15 = arith.constant 0 : index
    %28 = vector.load %arg6[%c0_14, %c0_15] : memref<8x128xf32, #tpu.memory_space<vmem>>, vector<8x128xf32>
    tpu.vector_store %arg6[%c0_14, %c0_15], %27 {strides = array<i32>} : memref<8x128xf32, #tpu.memory_space<vmem>>, vector<8x128xf32>,
    %29 = tpu.iota {dimensions = array<i32: 1>} : vector<1x128xi32>
    %c16_i32 = arith.constant 16 : i32
    %30 = vector.broadcast %c16_i32 : i32 to vector<1x128xi32>
    %31 = arith.cmpi slt, %29, %30 : vector<1x128xi32>
    %32 = math.log %25 : vector<8x128xf32>
    %cst_16 = arith.constant 0.000000e+00 : f32
    %33 = vector.shape_cast %31 : vector<1x128xi1> to vector<1x128xi1>
    %34 = vector.broadcast %33 : vector<1x128xi1> to vector<8x128xi1>
    %35 = vector.broadcast %cst_16 : f32 to vector<8x128xf32>
    %36 = arith.select %34, %32, %35 : vector<8x128xi1>, vector<8x128xf32>
    %cst_17 = arith.constant dense<0.000000e+00> : vector<8xf32>
    %37 = vector.multi_reduction <add>, %36, %cst_17 [1] : vector<8x128xf32> to vector<8xf32>
    %38 = vector.shape_cast %37 : vector<8xf32> to vector<1x8xf32>
    %c0_18 = arith.constant 0 : index
    %c0_19 = arith.constant 0 : index
    %39 = vector.load %arg7[%c0_18, %c0_19] : memref<1x8xf32, #tpu.memory_space<vmem>>, vector<1x8xf32>
    tpu.vector_store %arg7[%c0_18, %c0_19], %38 {strides = array<i32>} : memref<1x8xf32, #tpu.memory_space<vmem>>, vector<1x8xf32>,
    return
  }
  func.func @transform_0(%arg0: i32) -> (i32, i32) {
    %c0_i32 = arith.constant 0 : i32
    %c0_i32_0 = arith.constant 0 : i32
    return %arg0, %c0_i32 : i32, i32
  }
  func.func @transform_1(%arg0: i32) -> (i32, i32) {
    %c0_i32 = arith.constant 0 : i32
    %c0_i32_0 = arith.constant 0 : i32
    %c0_i32_1 = arith.constant 0 : i32
    return %c0_i32, %c0_i32_0 : i32, i32
  }
  func.func @transform_2(%arg0: i32) -> (i32, i32) {
    %c0_i32 = arith.constant 0 : i32
    %c0_i32_0 = arith.constant 0 : i32
    %c0_i32_1 = arith.constant 0 : i32
    return %c0_i32, %c0_i32_0 : i32, i32
  }
  func.func @transform_3(%arg0: i32) -> (i32, i32) {
    %c0_i32 = arith.constant 0 : i32
    %c0_i32_0 = arith.constant 0 : i32
    %c0_i32_1 = arith.constant 0 : i32
    return %c0_i32, %c0_i32_0 : i32, i32
  }
  func.func @transform_4(%arg0: i32) -> (i32, i32) {
    %c0_i32 = arith.constant 0 : i32
    %c0_i32_0 = arith.constant 0 : i32
    %c0_i32_1 = arith.constant 0 : i32
    return %c0_i32, %c0_i32_0 : i32, i32
  }
  func.func @transform_5(%arg0: i32) -> (i32, i32) {
    %c0_i32 = arith.constant 0 : i32
    %c0_i32_0 = arith.constant 0 : i32
    return %arg0, %c0_i32 : i32, i32
  }
  func.func @transform_6(%arg0: i32) -> (i32, i32) {
    %c0_i32 = arith.constant 0 : i32
    %c0_i32_0 = arith.constant 0 : i32
    return %c0_i32, %arg0 : i32, i32
  }
}

module attributes {stable_mosaic.version = 11 : i64} {
  func.func @kernel(%arg0: i32, %arg1: memref<8x128xf32, #tpu.memory_space<vmem>>, %arg2: memref<128x128xbf16, #tpu.memory_space<vmem>>, %arg3: memref<1x128xf32, #tpu.memory_space<vmem>>, %arg4: memref<128x256xbf16, #tpu.memory_space<vmem>>, %arg5: memref<1x256xf32, #tpu.memory_space<vmem>>, %arg6: memref<8x128xf32, #tpu.memory_space<vmem>>, %arg7: memref<1x8xf32, #tpu.memory_space<vmem>>) attributes {dimension_semantics = [#tpu.dimension_semantics<parallel>], iteration_bounds = array<i64: 1>, scalar_prefetch = 0 : i64, scratch_operands = 0 : i64, tpu.core_type = #tpu.core_type<tc>, window_params = [{transform_indices = @transform_0, window_bounds = array<i64: 8, 128>}, {pipeline_mode = #tpu.pipeline_mode<synchronous>, transform_indices = @transform_1, window_bounds = array<i64: 128, 128>}, {pipeline_mode = #tpu.pipeline_mode<synchronous>, transform_indices = @transform_2, window_bounds = array<i64: 1, 128>}, {pipeline_mode = #tpu.pipeline_mode<synchronous>, transform_indices = @transform_3, window_bounds = array<i64: 128, 256>}, {pipeline_mode = #tpu.pipeline_mode<synchronous>, transform_indices = @transform_4, window_bounds = array<i64: 1, 256>}, {transform_indices = @transform_5, window_bounds = array<i64: 8, 128>}, {transform_indices = @transform_6, window_bounds = array<i64: 1, 8>}]} {
    %c0 = arith.constant 0 : index
    %c0_0 = arith.constant 0 : index
    %0 = vector.load %arg1[%c0, %c0_0] : memref<8x128xf32, #tpu.memory_space<vmem>>, vector<8x128xf32>
    %1 = arith.truncf %0 : vector<8x128xf32> to vector<8x128xbf16>
    %c0_1 = arith.constant 0 : index
    %c0_2 = arith.constant 0 : index
    %2 = vector.load %arg2[%c0_1, %c0_2] : memref<128x128xbf16, #tpu.memory_space<vmem>>, vector<128x128xbf16>
    %cst = arith.constant dense<0.000000e+00> : vector<8x128xf32>
    %3 = tpu.matmul %1, %2, %cst {dimension_numbers = #tpu.dot_dimension_numbers<[1], [0], [0], [1], [0, 0, 1, 1], [], []>} : vector<8x128xbf16>, vector<128x128xbf16>, vector<8x128xf32> -> vector<8x128xf32>
    %c0_3 = arith.constant 0 : index
    %c0_4 = arith.constant 0 : index
    %4 = vector.load %arg3[%c0_3, %c0_4] : memref<1x128xf32, #tpu.memory_space<vmem>>, vector<1x128xf32>
    %5 = vector.broadcast %4 : vector<1x128xf32> to vector<8x128xf32>
    %6 = arith.addf %3, %5 : vector<8x128xf32>
    %cst_5 = arith.constant 0.000000e+00 : f32
    %7 = vector.broadcast %cst_5 : f32 to vector<8x128xf32>
    %8 = arith.maximumf %6, %7 : vector<8x128xf32>
    %9 = arith.truncf %8 : vector<8x128xf32> to vector<8x128xbf16>
    %c0_6 = arith.constant 0 : index
    %c0_7 = arith.constant 0 : index
    %10 = vector.load %arg4[%c0_6, %c0_7] : memref<128x256xbf16, #tpu.memory_space<vmem>>, vector<128x256xbf16>
    %cst_8 = arith.constant dense<0.000000e+00> : vector<8x256xf32>
    %11 = tpu.matmul %9, %10, %cst_8 {dimension_numbers = #tpu.dot_dimension_numbers<[1], [0], [0], [1], [0, 0, 1, 1], [], []>} : vector<8x128xbf16>, vector<128x256xbf16>, vector<8x256xf32> -> vector<8x256xf32>
    %c0_9 = arith.constant 0 : index
    %c0_10 = arith.constant 0 : index
    %12 = vector.load %arg5[%c0_9, %c0_10] : memref<1x256xf32, #tpu.memory_space<vmem>>, vector<1x256xf32>
    %13 = vector.broadcast %12 : vector<1x256xf32> to vector<8x256xf32>
    %14 = arith.addf %11, %13 : vector<8x256xf32>
    %15 = vector.extract_strided_slice %14 {offsets = [0, 0], sizes = [8, 128], strides = [1, 1]} : vector<8x256xf32> to vector<8x128xf32>
    %16 = vector.extract_strided_slice %14 {offsets = [0, 128], sizes = [8, 128], strides = [1, 1]} : vector<8x256xf32> to vector<8x128xf32>
    %cst_11 = arith.constant 2.000000e+00 : f32
    %17 = vector.broadcast %cst_11 : f32 to vector<8x128xf32>
    %18 = arith.addf %15, %17 : vector<8x128xf32>
    %19 = arith.negf %18 : vector<8x128xf32>
    %20 = math.exp %19 : vector<8x128xf32>
    %cst_12 = arith.constant 1.000000e+00 : f32
    %21 = vector.broadcast %cst_12 : f32 to vector<8x128xf32>
    %22 = arith.addf %21, %20 : vector<8x128xf32>
    %23 = arith.divf %21, %22 : vector<8x128xf32>
    %cst_13 = arith.constant 1.000000e-03 : f32
    %24 = vector.broadcast %cst_13 : f32 to vector<8x128xf32>
    %25 = arith.addf %23, %24 : vector<8x128xf32>
    %26 = arith.mulf %25, %0 : vector<8x128xf32>
    %27 = arith.addf %26, %16 : vector<8x128xf32>
    %c0_14 = arith.constant 0 : index
    %c0_15 = arith.constant 0 : index
    %28 = vector.load %arg6[%c0_14, %c0_15] : memref<8x128xf32, #tpu.memory_space<vmem>>, vector<8x128xf32>
    tpu.vector_store %arg6[%c0_14, %c0_15], %27 {strides = array<i32>} : memref<8x128xf32, #tpu.memory_space<vmem>>, vector<8x128xf32>,
    %29 = tpu.iota {dimensions = array<i32: 1>} : vector<1x128xi32>
    %c16_i32 = arith.constant 16 : i32
    %30 = vector.broadcast %c16_i32 : i32 to vector<1x128xi32>
    %31 = arith.cmpi slt, %29, %30 : vector<1x128xi32>
    %32 = math.log %25 : vector<8x128xf32>
    %cst_16 = arith.constant 0.000000e+00 : f32
    %33 = vector.shape_cast %31 : vector<1x128xi1> to vector<1x128xi1>
    %34 = vector.broadcast %33 : vector<1x128xi1> to vector<8x128xi1>
    %35 = vector.broadcast %cst_16 : f32 to vector<8x128xf32>
    %36 = arith.select %34, %32, %35 : vector<8x128xi1>, vector<8x128xf32>
    %cst_17 = arith.constant dense<0.000000e+00> : vector<8xf32>
    %37 = vector.multi_reduction <add>, %36, %cst_17 [1] : vector<8x128xf32> to vector<8xf32>
    %38 = vector.shape_cast %37 : vector<8xf32> to vector<1x8xf32>
    %c0_18 = arith.constant 0 : index
    %c0_19 = arith.constant 0 : index
    %39 = vector.load %arg7[%c0_18, %c0_19] : memref<1x8xf32, #tpu.memory_space<vmem>>, vector<1x8xf32>
    tpu.vector_store %arg7[%c0_18, %c0_19], %38 {strides = array<i32>} : memref<1x8xf32, #tpu.memory_space<vmem>>, vector<1x8xf32>,
    return
  }
  func.func @transform_0(%arg0: i32) -> (i32, i32) {
    %c0_i32 = arith.constant 0 : i32
    %c0_i32_0 = arith.constant 0 : i32
    return %arg0, %c0_i32 : i32, i32
  }
  func.func @transform_1(%arg0: i32) -> (i32, i32) {
    %c0_i32 = arith.constant 0 : i32
    %c0_i32_0 = arith.constant 0 : i32
    %c0_i32_1 = arith.constant 0 : i32
    return %c0_i32, %c0_i32_0 : i32, i32
  }
  func.func @transform_2(%arg0: i32) -> (i32, i32) {
    %c0_i32 = arith.constant 0 : i32
    %c0_i32_0 = arith.constant 0 : i32
    %c0_i32_1 = arith.constant 0 : i32
    return %c0_i32, %c0_i32_0 : i32, i32
  }
  func.func @transform_3(%arg0: i32) -> (i32, i32) {
    %c0_i32 = arith.constant 0 : i32
    %c0_i32_0 = arith.constant 0 : i32
    %c0_i32_1 = arith.constant 0 : i32
    return %c0_i32, %c0_i32_0 : i32, i32
  }
  func.func @transform_4(%arg0: i32) -> (i32, i32) {
    %c0_i32 = arith.constant 0 : i32
    %c0_i32_0 = arith.constant 0 : i32
    %c0_i32_1 = arith.constant 0 : i32
    return %c0_i32, %c0_i32_0 : i32, i32
  }
  func.func @transform_5(%arg0: i32) -> (i32, i32) {
    %c0_i32 = arith.constant 0 : i32
    %c0_i32_0 = arith.constant 0 : i32
    return %arg0, %c0_i32 : i32, i32
  }
  func.func @transform_6(%arg0: i32) -> (i32, i32) {
    %c0_i32 = arith.constant 0 : i32
    %c0_i32_0 = arith.constant 0 : i32
    return %c0_i32, %arg0 : i32, i32
  }
}

</mosaic_0001>

<llo_original>
// kernel: tpu_custom_call.1
$region0: #{tpu_custom_call.1}
  #allocation0 [shape = 'u32[]', space=smem, size = 0x4, offset = 0x4, fixed_abs, tag = 'smem constant byte address 0x4 - core index']
  #allocation1 [shape = 'u32[144,128]{1,0:T(1,128)}', space=vmem, size = 0x12000, scoped, tag = 'internal scratch']
  %s0 = inlined_call_operand.hbm [shape: f32[8,128], index: 0, kind: input, shape index: {}]
  %s1 = inlined_call_operand.hbm [shape: bf16[128,128], index: 1, kind: input, shape index: {}]
  %s2 = inlined_call_operand.vmem [shape: f32[1,128], index: 2, kind: input, shape index: {}]
  %s3 = inlined_call_operand.hbm [shape: bf16[128,256], index: 3, kind: input, shape index: {}]
  %s4 = inlined_call_operand.vmem [shape: f32[1,256], index: 4, kind: input, shape index: {}]
  %s5 = inlined_call_operand.hbm [shape: f32[8,128], index: 5, kind: output, shape index: {0}]
  %s6 = inlined_call_operand.hbm [shape: f32[1,8], index: 6, kind: output, shape index: {1}]
  %7 = xla_tuple %s5, %s6
  %s8 = sld [smem:[#allocation0]]
  $region50: #{tpu_custom_call.1} parent=0
    _
  %s10 = ssub.s32 1, %s8
  %s11 = scalar_select 0, %s10, %s8
  $region1: #{tpu_custom_call.1} parent=0
    #allocation2 [shape = 'u8[4096]{0}', space=vmem, size = 0x1000, scoped, tag = 'input window, operand 0, single buffered']
    #allocation3 [shape = 's32[1]{0}', space=sflag, size = 0x4, scoped, tag = 'scoped memory for tpu_custom_call.1']
    #allocation4 [shape = 's32[1]{0}', space=sflag, size = 0x4, scoped, tag = 'scoped memory for tpu_custom_call.1']
    #allocation5 [shape = 'u8[32768]{0}', space=vmem, size = 0x8000, scoped, tag = 'input window, operand 1, single buffered']
    #allocation6 [shape = 's32[1]{0}', space=sflag, size = 0x4, scoped, tag = 'scoped memory for tpu_custom_call.1']
    #allocation7 [shape = 'u8[65536]{0}', space=vmem, size = 0x10000, scoped, tag = 'input window, operand 3, single buffered']
    #allocation8 [shape = 'u8[4096]{0}', space=vmem, size = 0x1000, scoped, tag = 'output window, operand 0, single buffered']
    #allocation9 [shape = 'u8[512]{0}', space=vmem, size = 0x400, scoped, tag = 'output window, operand 1, single buffered']
    #allocation10 [shape = 's32[1]{0}', space=sflag, size = 0x4, scoped, tag = 'scoped memory for tpu_custom_call.1']
    %12 = vsyncpa [#allocation3], 0
    %13 = vsyncpa [#allocation6], 0
    %14 = vsyncpa [#allocation4], 0
    %15 = vsyncpa [#allocation10], 0
    // Predicated region
    $region2: #{tpu_custom_call.1} parent=1 // pred_check
      _
    $region3: #{tpu_custom_call.1} parent=1 // pred_check_branch
      %17 = sbr.rel (0) target = $region5
    $region4: #{tpu_custom_call.1} parent=1 // pred_region
      %s19 = ssub.s32 128, 128
      %20 = vsyncadd [#allocation3], %s19
      %s22 = sshll.u32 [#allocation2], 4
      %s23 = int_to_ptr.vmem [resolvable:$true] %s22
      %25 = dma.hbm_to_vmem [thread:$0]  %s0, 128, %s23, [#allocation3]
    $region5: #{tpu_custom_call.1} parent=1 // pred_fallthru
      _
    // Predicated region
    $region6: #{tpu_custom_call.1} parent=1 // pred_check
      _
    $region7: #{tpu_custom_call.1} parent=1 // pred_check_branch
      %27 = sbr.rel (0) target = $region9
    $region8: #{tpu_custom_call.1} parent=1 // pred_region
      %s29 = ssub.s32 1024, 1024
      %30 = vsyncadd [#allocation6], %s29
      %s31 = sshll.u32 [#allocation5], 4
      %s32 = int_to_ptr.vmem [resolvable:$true] %s31
      %37 = dma.hbm_to_vmem [thread:$0]  %s1, 1024, %s32, [#allocation6], 64, 64, 4
    $region9: #{tpu_custom_call.1} parent=1 // pred_fallthru
      _
    // Predicated region
    $region10: #{tpu_custom_call.1} parent=1 // pred_check
      _
    $region11: #{tpu_custom_call.1} parent=1 // pred_check_branch
      %39 = sbr.rel (0) target = $region13
    $region12: #{tpu_custom_call.1} parent=1 // pred_region
      _
    $region13: #{tpu_custom_call.1} parent=1 // pred_fallthru
      _
    // Predicated region
    $region14: #{tpu_custom_call.1} parent=1 // pred_check
      _
    $region15: #{tpu_custom_call.1} parent=1 // pred_check_branch
      %41 = sbr.rel (0) target = $region17
    $region16: #{tpu_custom_call.1} parent=1 // pred_region
      %s43 = ssub.s32 2048, 2048
      %44 = vsyncadd [#allocation6], %s43
      %s45 = sshll.u32 [#allocation7], 4
      %s46 = int_to_ptr.vmem [resolvable:$true] %s45
      %51 = dma.hbm_to_vmem [thread:$0]  %s3, 2048, %s46, [#allocation6], 128, 128, 8
    $region17: #{tpu_custom_call.1} parent=1 // pred_fallthru
      _
    // Predicated region
    $region18: #{tpu_custom_call.1} parent=1 // pred_check
      _
    $region19: #{tpu_custom_call.1} parent=1 // pred_check_branch
      %53 = sbr.rel (0) target = $region21
    $region20: #{tpu_custom_call.1} parent=1 // pred_region
      _
    $region21: #{tpu_custom_call.1} parent=1 // pred_fallthru
      _
    // Predicated region
    $region22: #{tpu_custom_call.1} parent=1 // pred_check
      _
    $region23: #{tpu_custom_call.1} parent=1 // pred_check_branch
      %55 = sbr.rel (0) target = $region25
    $region24: #{tpu_custom_call.1} parent=1 // pred_region
      %56 = dma.done [#allocation3], 128
    $region25: #{tpu_custom_call.1} parent=1 // pred_fallthru
      _
    // Predicated region
    $region26: #{tpu_custom_call.1} parent=1 // pred_check
      _
    $region27: #{tpu_custom_call.1} parent=1 // pred_check_branch
      %58 = sbr.rel (0) target = $region29
    $region28: #{tpu_custom_call.1} parent=1 // pred_region
      %59 = dma.done [#allocation6], 1024
    $region29: #{tpu_custom_call.1} parent=1 // pred_fallthru
      _
    // Predicated region
    $region30: #{tpu_custom_call.1} parent=1 // pred_check
      _
    $region31: #{tpu_custom_call.1} parent=1 // pred_check_branch
      %61 = sbr.rel (0) target = $region33
    $region32: #{tpu_custom_call.1} parent=1 // pred_region
      %62 = dma.done [#allocation6], 2048
    $region33: #{tpu_custom_call.1} parent=1 // pred_fallthru
      _
    %v64 = vld [vmem:[#allocation2] sm:$0xff]
    %v65 = vpack.c.bf16 %v64, %v64
    %v66 = vld [vmem:[#allocation5] sm:$0xf]
    %v67 = vld [vmem:[#allocation5 + $0x4] sm:$0xf]
    %v68 = vld [vmem:[#allocation5 + $0x8] sm:$0xf]
    %v69 = vld [vmem:[#allocation5 + $0xc] sm:$0xf]
    %v70 = vld [vmem:[#allocation5 + $0x10] sm:$0xf]
    %v71 = vld [vmem:[#allocation5 + $0x14] sm:$0xf]
    %v72 = vld [vmem:[#allocation5 + $0x18] sm:$0xf]
    %v73 = vld [vmem:[#allocation5 + $0x1c] sm:$0xf]
    %v74 = vld [vmem:[#allocation5 + $0x20] sm:$0xf]
    %v75 = vld [vmem:[#allocation5 + $0x24] sm:$0xf]
    %v76 = vld [vmem:[#allocation5 + $0x28] sm:$0xf]
    %v77 = vld [vmem:[#allocation5 + $0x2c] sm:$0xf]
    %v78 = vld [vmem:[#allocation5 + $0x30] sm:$0xf]
    %v79 = vld [vmem:[#allocation5 + $0x34] sm:$0xf]
    %v80 = vld [vmem:[#allocation5 + $0x38] sm:$0xf]
    %v81 = vld [vmem:[#allocation5 + $0x3c] sm:$0xf]
    %v82 = vld [vmem:[%s2] sm:$0x1]
    %v84 = vlaneseq
    %v85 = vshrl.u32 %v84, 7
    %v86 = vsub.s32 0, %v85
    %v87 = vrot.slane %v82, %v86
    %v105 = vunpack.c.l.b16 %v66
    %v106 = vunpack.c.l.b16 %v67
    %v107 = vunpack.c.l.b16 %v68
    %v108 = vunpack.c.l.b16 %v69
    %v109 = vunpack.c.l.b16 %v70
    %v110 = vunpack.c.l.b16 %v71
    %v111 = vunpack.c.l.b16 %v72
    %v112 = vunpack.c.l.b16 %v73
    %v113 = vunpack.c.l.b16 %v74
    %v114 = vunpack.c.l.b16 %v75
    %v115 = vunpack.c.l.b16 %v76
    %v116 = vunpack.c.l.b16 %v77
    %v117 = vunpack.c.l.b16 %v78
    %v118 = vunpack.c.l.b16 %v79
    %v119 = vunpack.c.l.b16 %v80
    %v120 = vunpack.c.l.b16 %v81
    %v121 = vpack.c.b16 %v106, %v105
    %v122 = vpack.c.b16 %v108, %v107
    %v123 = vpack.c.b16 %v110, %v109
    %v124 = vpack.c.b16 %v112, %v111
    %v125 = vpack.c.b16 %v114, %v113
    %v126 = vpack.c.b16 %v116, %v115
    %v127 = vpack.c.b16 %v118, %v117
    %v128 = vpack.c.b16 %v120, %v119
    %137 = vmatprep.subr.bf16.mxu0 0
    %138 = vmatpush1.bf16.msra.mxu0 %v121
    %139 = vmatprep.subr.bf16.mxu0 0
    %140 = vmatpush1.bf16.msra.mxu0 %v122
    %141 = vmatprep.subr.bf16.mxu0 0
    %142 = vmatpush1.bf16.msra.mxu0 %v123
    %143 = vmatprep.subr.bf16.mxu0 0
    %144 = vmatpush1.bf16.msra.mxu0 %v124
    %145 = vmatprep.subr.bf16.mxu0 0
    %146 = vmatpush1.bf16.msra.mxu0 %v125
    %147 = vmatprep.subr.bf16.mxu0 0
    %148 = vmatpush1.bf16.msra.mxu0 %v126
    %149 = vmatprep.subr.bf16.mxu0 0
    %150 = vmatpush1.bf16.msra.mxu0 %v127
    %151 = vmatprep.subr.bf16.mxu0 0
    %152 = vmatpush1.bf16.msra.mxu0 %v128
    %153 = vmatprep.subr.bf16.mxu0 0
    %154 = vmatpush1.bf16.msra.mxu0 0
    %155 = vmatprep.subr.bf16.mxu0 0
    %156 = vmatpush1.bf16.msra.mxu0 0
    %157 = vmatprep.subr.bf16.mxu0 0
    %158 = vmatpush1.bf16.msra.mxu0 0
    %159 = vmatprep.subr.bf16.mxu0 0
    %160 = vmatpush1.bf16.msra.mxu0 0
    %161 = vmatprep.subr.bf16.mxu0 0
    %162 = vmatpush1.bf16.msra.mxu0 0
    %163 = vmatprep.subr.bf16.mxu0 0
    %164 = vmatpush1.bf16.msra.mxu0 0
    %165 = vmatprep.subr.bf16.mxu0 0
    %166 = vmatpush1.bf16.msra.mxu0 0
    %167 = vmatprep.subr.bf16.mxu0 0
    %168 = vmatpush1.bf16.msra.mxu0 0
    %169 = vmatprep.mubr.bf16.mxu0 0
    %170 = vmatmul.mubr.bf16.gmra.mrb[0].mxu0 %v65
    %v171 = vpop.f32.mrb[0].mxu0
    %v172 = vadd.f32 %v87, %v171
    %v173 = vpop.f32.mrb[0].mxu0
    %v174 = vpop.f32.mrb[0].mxu0
    %v175 = vpop.f32.mrb[0].mxu0
    %176 = vdwg.mxu0
    %v177 = vmax.f32 %v172, 0.0
    %v178 = vpack.c.bf16 %v177, %v177
    %v179 = vld [vmem:[#allocation7] sm:$0xff]
    %v180 = vld [vmem:[#allocation7 + $0x8] sm:$0xff]
    %v181 = vld [vmem:[#allocation7 + $0x10] sm:$0xff]
    %v182 = vld [vmem:[#allocation7 + $0x18] sm:$0xff]
    %v183 = vld [vmem:[#allocation7 + $0x20] sm:$0xff]
    %v184 = vld [vmem:[#allocation7 + $0x28] sm:$0xff]
    %v185 = vld [vmem:[#allocation7 + $0x30] sm:$0xff]
    %v186 = vld [vmem:[#allocation7 + $0x38] sm:$0xff]
    %v187 = vld [vmem:[#allocation7 + $0x40] sm:$0xff]
    %v188 = vld [vmem:[#allocation7 + $0x48] sm:$0xff]
    %v189 = vld [vmem:[#allocation7 + $0x50] sm:$0xff]
    %v190 = vld [vmem:[#allocation7 + $0x58] sm:$0xff]
    %v191 = vld [vmem:[#allocation7 + $0x60] sm:$0xff]
    %v192 = vld [vmem:[#allocation7 + $0x68] sm:$0xff]
    %v193 = vld [vmem:[#allocation7 + $0x70] sm:$0xff]
    %v194 = vld [vmem:[#allocation7 + $0x78] sm:$0xff]
    %v195 = vld [vmem:[%s4] sm:$0x3]
    %v197 = vlaneseq
    %v198 = vshrl.u32 %v197, 7
    %v199 = vsub.s32 0, %v198
    %v200 = vrot.slane %v195, %v199
    %v201 = vlaneseq
    %v202 = vshrl.u32 %v201, 7
    %v203 = vsub.s32 1, %v202
    %v204 = vrot.slane %v195, %v203
    %v223 = vunpack.c.l.b16 %v179
    %v224 = vunpack.c.h.b16 %v179
    %v225 = vunpack.c.l.b16 %v180
    %v226 = vunpack.c.h.b16 %v180
    %v227 = vunpack.c.l.b16 %v181
    %v228 = vunpack.c.h.b16 %v181
    %v229 = vunpack.c.l.b16 %v182
    %v230 = vunpack.c.h.b16 %v182
    %v231 = vunpack.c.l.b16 %v183
    %v232 = vunpack.c.h.b16 %v183
    %v233 = vunpack.c.l.b16 %v184
    %v234 = vunpack.c.h.b16 %v184
    %v235 = vunpack.c.l.b16 %v185
    %v236 = vunpack.c.h.b16 %v185
    %v237 = vunpack.c.l.b16 %v186
    %v238 = vunpack.c.h.b16 %v186
    %v239 = vunpack.c.l.b16 %v187
    %v240 = vunpack.c.h.b16 %v187
    %v241 = vunpack.c.l.b16 %v188
    %v242 = vunpack.c.h.b16 %v188
    %v243 = vunpack.c.l.b16 %v189
    %v244 = vunpack.c.h.b16 %v189
    %v245 = vunpack.c.l.b16 %v190
    %v246 = vunpack.c.h.b16 %v190
    %v247 = vunpack.c.l.b16 %v191
    %v248 = vunpack.c.h.b16 %v191
    %v249 = vunpack.c.l.b16 %v192
    %v250 = vunpack.c.h.b16 %v192
    %v251 = vunpack.c.l.b16 %v193
    %v252 = vunpack.c.h.b16 %v193
    %v253 = vunpack.c.l.b16 %v194
    %v254 = vunpack.c.h.b16 %v194
    %v255 = vpack.c.b16 %v225, %v223
    %v256 = vpack.c.b16 %v226, %v224
    %v257 = vpack.c.b16 %v229, %v227
    %v258 = vpack.c.b16 %v230, %v228
    %v259 = vpack.c.b16 %v233, %v231
    %v260 = vpack.c.b16 %v234, %v232
    %v261 = vpack.c.b16 %v237, %v235
    %v262 = vpack.c.b16 %v238, %v236
    %v263 = vpack.c.b16 %v241, %v239
    %v264 = vpack.c.b16 %v242, %v240
    %v265 = vpack.c.b16 %v245, %v243
    %v266 = vpack.c.b16 %v246, %v244
    %v267 = vpack.c.b16 %v249, %v247
    %v268 = vpack.c.b16 %v250, %v248
    %v269 = vpack.c.b16 %v253, %v251
    %v270 = vpack.c.b16 %v254, %v252
    %287 = vmatprep.subr.bf16.mxu0 %v256
    %288 = vmatpush1.bf16.msra.mxu0 %v255
    %289 = vmatprep.subr.bf16.mxu0 %v258
    %290 = vmatpush1.bf16.msra.mxu0 %v257
    %291 = vmatprep.subr.bf16.mxu0 %v260
    %292 = vmatpush1.bf16.msra.mxu0 %v259
    %293 = vmatprep.subr.bf16.mxu0 %v262
    %294 = vmatpush1.bf16.msra.mxu0 %v261
    %295 = vmatprep.subr.bf16.mxu0 %v264
    %296 = vmatpush1.bf16.msra.mxu0 %v263
    %297 = vmatprep.subr.bf16.mxu0 %v266
    %298 = vmatpush1.bf16.msra.mxu0 %v265
    %299 = vmatprep.subr.bf16.mxu0 %v268
    %300 = vmatpush1.bf16.msra.mxu0 %v267
    %301 = vmatprep.subr.bf16.mxu0 %v270
    %302 = vmatpush1.bf16.msra.mxu0 %v269
    %303 = vmatprep.subr.bf16.mxu0 0
    %304 = vmatpush1.bf16.msra.mxu0 0
    %305 = vmatprep.subr.bf16.mxu0 0
    %306 = vmatpush1.bf16.msra.mxu0 0
    %307 = vmatprep.subr.bf16.mxu0 0
    %308 = vmatpush1.bf16.msra.mxu0 0
    %309 = vmatprep.subr.bf16.mxu0 0
    %310 = vmatpush1.bf16.msra.mxu0 0
    %311 = vmatprep.subr.bf16.mxu0 0
    %312 = vmatpush1.bf16.msra.mxu0 0
    %313 = vmatprep.subr.bf16.mxu0 0
    %314 = vmatpush1.bf16.msra.mxu0 0
    %315 = vmatprep.subr.bf16.mxu0 0
    %316 = vmatpush1.bf16.msra.mxu0 0
    %317 = vmatprep.subr.bf16.mxu0 0
    %318 = vmatpush1.bf16.msra.mxu0 0
    %319 = vmatprep.mubr.bf16.mxu0 0
    %320 = vmatmul.mubr.bf16.gmra.mrb[0].mxu0 %v178
    %v321 = vpop.f32.mrb[0].mxu0
    %v322 = vadd.f32 %v200, %v321
    %v323 = vpop.f32.mrb[0].mxu0
    %v324 = vadd.f32 %v204, %v323
    %v325 = vpop.f32.mrb[0].mxu0
    %v326 = vpop.f32.mrb[0].mxu0
    %327 = vdwg.mxu0
    %v328 = vadd.f32 %v322, 2.0
    %v329 = vxor.u32 %v328, 2147483648
    %v330 = vmul.f32 %v329, 1.442695
    %v331 = vpow.pop %v330
    %v332 = vadd.f32 %v331, 1.0
    %v333 = vrcp.pop %v332
    %v334 = vmul.f32 1.0, %v333
    %v335 = vadd.f32 %v334, 0.001
    %v336 = vmul.f32 %v335, %v64
    %v337 = vadd.f32 %v336, %v324
    %338 = vst [vmem:[#allocation8] sm:$0xff] %v337
    %v339 = vlaneseq
    %v340 = vand.u32 %v339, 127
    %vm341 = vcmp.lt.s32.totalorder %v340, 16
    %v342 = vlog2.pop %v335
    %v343 = vmul.f32 %v342, 0.6931472
    %v344 = vsel %vm341, 1, 0
    %vm345 = vcmp.eq.s32.totalorder %v344, 1
    %v346 = vsel %vm345, %v343, 0.0
    %347 = vadd.xlane.f32.xlu0 %v346
    %v348 = vpop.xlane.xlu0 %347
    %v350 = vlaneseq
    %v351 = vshrl.u32 %v350, 7
    %v352 = vsub.s32 %v340, %v351
    %v353 = vrot.slane %v348, %v352
    %vm355 = vcmask 57344
    %356 = vst.msk [vmem:[#allocation9] sm:$0x1] %vm355, %v353
    // Predicated region
    $region34: #{tpu_custom_call.1} parent=1 // pred_check
      _
    $region35: #{tpu_custom_call.1} parent=1 // pred_check_branch
      %358 = sbr.rel (0) target = $region37
    $region36: #{tpu_custom_call.1} parent=1 // pred_region
      %s360 = ssub.s32 128, 128
      %361 = vsyncadd [#allocation4], %s360
      %s363 = sshll.u32 [#allocation8], 4
      %s364 = int_to_ptr.vmem [resolvable:$true] %s363
      %366 = dma.vmem_to_hbm [thread:$0]  %s364, 128, %s5, [#allocation4]
    $region37: #{tpu_custom_call.1} parent=1 // pred_fallthru
      _
    // Predicated region
    $region38: #{tpu_custom_call.1} parent=1 // pred_check
      _
    $region39: #{tpu_custom_call.1} parent=1 // pred_check_branch
      %368 = sbr.rel (0) target = $region41
    $region40: #{tpu_custom_call.1} parent=1 // pred_region
      %s370 = ssub.s32 16, 16
      %371 = vsyncadd [#allocation10], %s370
      %s373 = sshll.u32 [#allocation9], 4
      %s374 = int_to_ptr.vmem [resolvable:$true] %s373
      %376 = dma.vmem_to_hbm [thread:$0]  %s374, 16, %s6, [#allocation10]
    $region41: #{tpu_custom_call.1} parent=1 // pred_fallthru
      _
    // Predicated region
    $region42: #{tpu_custom_call.1} parent=1 // pred_check
      _
    $region43: #{tpu_custom_call.1} parent=1 // pred_check_branch
      %378 = sbr.rel (0) target = $region45
    $region44: #{tpu_custom_call.1} parent=1 // pred_region
      %379 = dma.done [#allocation4], 128
    $region45: #{tpu_custom_call.1} parent=1 // pred_fallthru
      _
    // Predicated region
    $region46: #{tpu_custom_call.1} parent=1 // pred_check
      _
    $region47: #{tpu_custom_call.1} parent=1 // pred_check_branch
      %381 = sbr.rel (0) target = $region49
    $region48: #{tpu_custom_call.1} parent=1 // pred_region
      %382 = dma.done [#allocation10], 16
    $region49: #{tpu_custom_call.1} parent=1 // pred_fallthru
      _
    %383 = vsyncpa [#allocation3], 1
    %384 = vsyncpa [#allocation6], 1
    %385 = vsyncpa [#allocation4], 1
    %386 = vsyncpa [#allocation10], 1

// kernel: tpu_custom_call.1
$region0: #{tpu_custom_call.1}
  #allocation0 [shape = 'u32[]', space=smem, size = 0x4, offset = 0x4, fixed_abs, tag = 'smem constant byte address 0x4 - core index']
  #allocation1 [shape = 'u32[144,128]{1,0:T(1,128)}', space=vmem, size = 0x12000, scoped, tag = 'internal scratch']
  %s0 = inlined_call_operand.hbm [shape: f32[8,128], index: 0, kind: input, shape index: {}]
  %s1 = inlined_call_operand.hbm [shape: bf16[128,128], index: 1, kind: input, shape index: {}]
  %s2 = inlined_call_operand.vmem [shape: f32[1,128], index: 2, kind: input, shape index: {}]
  %s3 = inlined_call_operand.hbm [shape: bf16[128,256], index: 3, kind: input, shape index: {}]
  %s4 = inlined_call_operand.vmem [shape: f32[1,256], index: 4, kind: input, shape index: {}]
  %s5 = inlined_call_operand.hbm [shape: f32[8,128], index: 5, kind: output, shape index: {0}]
  %s6 = inlined_call_operand.hbm [shape: f32[1,8], index: 6, kind: output, shape index: {1}]
  %7 = xla_tuple %s5, %s6
  %s8 = sld [smem:[#allocation0]]
  $region50: #{tpu_custom_call.1} parent=0
    _
  %s10 = ssub.s32 1, %s8
  %s11 = scalar_select 0, %s10, %s8
  $region1: #{tpu_custom_call.1} parent=0
    #allocation2 [shape = 'u8[4096]{0}', space=vmem, size = 0x1000, scoped, tag = 'input window, operand 0, single buffered']
    #allocation3 [shape = 's32[1]{0}', space=sflag, size = 0x4, scoped, tag = 'scoped memory for tpu_custom_call.1']
    #allocation4 [shape = 's32[1]{0}', space=sflag, size = 0x4, scoped, tag = 'scoped memory for tpu_custom_call.1']
    #allocation5 [shape = 'u8[32768]{0}', space=vmem, size = 0x8000, scoped, tag = 'input window, operand 1, single buffered']
    #allocation6 [shape = 's32[1]{0}', space=sflag, size = 0x4, scoped, tag = 'scoped memory for tpu_custom_call.1']
    #allocation7 [shape = 'u8[65536]{0}', space=vmem, size = 0x10000, scoped, tag = 'input window, operand 3, single buffered']
    #allocation8 [shape = 'u8[4096]{0}', space=vmem, size = 0x1000, scoped, tag = 'output window, operand 0, single buffered']
    #allocation9 [shape = 'u8[512]{0}', space=vmem, size = 0x400, scoped, tag = 'output window, operand 1, single buffered']
    #allocation10 [shape = 's32[1]{0}', space=sflag, size = 0x4, scoped, tag = 'scoped memory for tpu_custom_call.1']
    %12 = vsyncpa [#allocation3], 0
    %13 = vsyncpa [#allocation6], 0
    %14 = vsyncpa [#allocation4], 0
    %15 = vsyncpa [#allocation10], 0
    // Predicated region
    $region2: #{tpu_custom_call.1} parent=1 // pred_check
      _
    $region3: #{tpu_custom_call.1} parent=1 // pred_check_branch
      %17 = sbr.rel (0) target = $region5
    $region4: #{tpu_custom_call.1} parent=1 // pred_region
      %s19 = ssub.s32 128, 128
      %20 = vsyncadd [#allocation3], %s19
      %s22 = sshll.u32 [#allocation2], 4
      %s23 = int_to_ptr.vmem [resolvable:$true] %s22
      %25 = dma.hbm_to_vmem [thread:$0]  %s0, 128, %s23, [#allocation3]
    $region5: #{tpu_custom_call.1} parent=1 // pred_fallthru
      _
    // Predicated region
    $region6: #{tpu_custom_call.1} parent=1 // pred_check
      _
    $region7: #{tpu_custom_call.1} parent=1 // pred_check_branch
      %27 = sbr.rel (0) target = $region9
    $region8: #{tpu_custom_call.1} parent=1 // pred_region
      %s29 = ssub.s32 1024, 1024
      %30 = vsyncadd [#allocation6], %s29
      %s31 = sshll.u32 [#allocation5], 4
      %s32 = int_to_ptr.vmem [resolvable:$true] %s31
      %37 = dma.hbm_to_vmem [thread:$0]  %s1, 1024, %s32, [#allocation6], 64, 64, 4
    $region9: #{tpu_custom_call.1} parent=1 // pred_fallthru
      _
    // Predicated region
    $region10: #{tpu_custom_call.1} parent=1 // pred_check
      _
    $region11: #{tpu_custom_call.1} parent=1 // pred_check_branch
      %39 = sbr.rel (0) target = $region13
    $region12: #{tpu_custom_call.1} parent=1 // pred_region
      _
    $region13: #{tpu_custom_call.1} parent=1 // pred_fallthru
      _
    // Predicated region
    $region14: #{tpu_custom_call.1} parent=1 // pred_check
      _
    $region15: #{tpu_custom_call.1} parent=1 // pred_check_branch
      %41 = sbr.rel (0) target = $region17
    $region16: #{tpu_custom_call.1} parent=1 // pred_region
      %s43 = ssub.s32 2048, 2048
      %44 = vsyncadd [#allocation6], %s43
      %s45 = sshll.u32 [#allocation7], 4
      %s46 = int_to_ptr.vmem [resolvable:$true] %s45
      %51 = dma.hbm_to_vmem [thread:$0]  %s3, 2048, %s46, [#allocation6], 128, 128, 8
    $region17: #{tpu_custom_call.1} parent=1 // pred_fallthru
      _
    // Predicated region
    $region18: #{tpu_custom_call.1} parent=1 // pred_check
      _
    $region19: #{tpu_custom_call.1} parent=1 // pred_check_branch
      %53 = sbr.rel (0) target = $region21
    $region20: #{tpu_custom_call.1} parent=1 // pred_region
      _
    $region21: #{tpu_custom_call.1} parent=1 // pred_fallthru
      _
    // Predicated region
    $region22: #{tpu_custom_call.1} parent=1 // pred_check
      _
    $region23: #{tpu_custom_call.1} parent=1 // pred_check_branch
      %55 = sbr.rel (0) target = $region25
    $region24: #{tpu_custom_call.1} parent=1 // pred_region
      %56 = dma.done [#allocation3], 128
    $region25: #{tpu_custom_call.1} parent=1 // pred_fallthru
      _
    // Predicated region
    $region26: #{tpu_custom_call.1} parent=1 // pred_check
      _
    $region27: #{tpu_custom_call.1} parent=1 // pred_check_branch
      %58 = sbr.rel (0) target = $region29
    $region28: #{tpu_custom_call.1} parent=1 // pred_region
      %59 = dma.done [#allocation6], 1024
    $region29: #{tpu_custom_call.1} parent=1 // pred_fallthru
      _
    // Predicated region
    $region30: #{tpu_custom_call.1} parent=1 // pred_check
      _
    $region31: #{tpu_custom_call.1} parent=1 // pred_check_branch
      %61 = sbr.rel (0) target = $region33
    $region32: #{tpu_custom_call.1} parent=1 // pred_region
      %62 = dma.done [#allocation6], 2048
    $region33: #{tpu_custom_call.1} parent=1 // pred_fallthru
      _
    %v64 = vld [vmem:[#allocation2] sm:$0xff]
    %v65 = vpack.c.bf16 %v64, %v64
    %v66 = vld [vmem:[#allocation5] sm:$0xf]
    %v67 = vld [vmem:[#allocation5 + $0x4] sm:$0xf]
    %v68 = vld [vmem:[#allocation5 + $0x8] sm:$0xf]
    %v69 = vld [vmem:[#allocation5 + $0xc] sm:$0xf]
    %v70 = vld [vmem:[#allocation5 + $0x10] sm:$0xf]
    %v71 = vld [vmem:[#allocation5 + $0x14] sm:$0xf]
    %v72 = vld [vmem:[#allocation5 + $0x18] sm:$0xf]
    %v73 = vld [vmem:[#allocation5 + $0x1c] sm:$0xf]
    %v74 = vld [vmem:[#allocation5 + $0x20] sm:$0xf]
    %v75 = vld [vmem:[#allocation5 + $0x24] sm:$0xf]
    %v76 = vld [vmem:[#allocation5 + $0x28] sm:$0xf]
    %v77 = vld [vmem:[#allocation5 + $0x2c] sm:$0xf]
    %v78 = vld [vmem:[#allocation5 + $0x30] sm:$0xf]
    %v79 = vld [vmem:[#allocation5 + $0x34] sm:$0xf]
    %v80 = vld [vmem:[#allocation5 + $0x38] sm:$0xf]
    %v81 = vld [vmem:[#allocation5 + $0x3c] sm:$0xf]
    %v82 = vld [vmem:[%s2] sm:$0x1]
    %v84 = vlaneseq
    %v85 = vshrl.u32 %v84, 7
    %v86 = vsub.s32 0, %v85
    %v87 = vrot.slane %v82, %v86
    %v105 = vunpack.c.l.b16 %v66
    %v106 = vunpack.c.l.b16 %v67
    %v107 = vunpack.c.l.b16 %v68
    %v108 = vunpack.c.l.b16 %v69
    %v109 = vunpack.c.l.b16 %v70
    %v110 = vunpack.c.l.b16 %v71
    %v111 = vunpack.c.l.b16 %v72
    %v112 = vunpack.c.l.b16 %v73
    %v113 = vunpack.c.l.b16 %v74
    %v114 = vunpack.c.l.b16 %v75
    %v115 = vunpack.c.l.b16 %v76
    %v116 = vunpack.c.l.b16 %v77
    %v117 = vunpack.c.l.b16 %v78
    %v118 = vunpack.c.l.b16 %v79
    %v119 = vunpack.c.l.b16 %v80
    %v120 = vunpack.c.l.b16 %v81
    %v121 = vpack.c.b16 %v106, %v105
    %v122 = vpack.c.b16 %v108, %v107
    %v123 = vpack.c.b16 %v110, %v109
    %v124 = vpack.c.b16 %v112, %v111
    %v125 = vpack.c.b16 %v114, %v113
    %v126 = vpack.c.b16 %v116, %v115
    %v127 = vpack.c.b16 %v118, %v117
    %v128 = vpack.c.b16 %v120, %v119
    %137 = vmatprep.subr.bf16.mxu0 0
    %138 = vmatpush1.bf16.msra.mxu0 %v121
    %139 = vmatprep.subr.bf16.mxu0 0
    %140 = vmatpush1.bf16.msra.mxu0 %v122
    %141 = vmatprep.subr.bf16.mxu0 0
    %142 = vmatpush1.bf16.msra.mxu0 %v123
    %143 = vmatprep.subr.bf16.mxu0 0
    %144 = vmatpush1.bf16.msra.mxu0 %v124
    %145 = vmatprep.subr.bf16.mxu0 0
    %146 = vmatpush1.bf16.msra.mxu0 %v125
    %147 = vmatprep.subr.bf16.mxu0 0
    %148 = vmatpush1.bf16.msra.mxu0 %v126
    %149 = vmatprep.subr.bf16.mxu0 0
    %150 = vmatpush1.bf16.msra.mxu0 %v127
    %151 = vmatprep.subr.bf16.mxu0 0
    %152 = vmatpush1.bf16.msra.mxu0 %v128
    %153 = vmatprep.subr.bf16.mxu0 0
    %154 = vmatpush1.bf16.msra.mxu0 0
    %155 = vmatprep.subr.bf16.mxu0 0
    %156 = vmatpush1.bf16.msra.mxu0 0
    %157 = vmatprep.subr.bf16.mxu0 0
    %158 = vmatpush1.bf16.msra.mxu0 0
    %159 = vmatprep.subr.bf16.mxu0 0
    %160 = vmatpush1.bf16.msra.mxu0 0
    %161 = vmatprep.subr.bf16.mxu0 0
    %162 = vmatpush1.bf16.msra.mxu0 0
    %163 = vmatprep.subr.bf16.mxu0 0
    %164 = vmatpush1.bf16.msra.mxu0 0
    %165 = vmatprep.subr.bf16.mxu0 0
    %166 = vmatpush1.bf16.msra.mxu0 0
    %167 = vmatprep.subr.bf16.mxu0 0
    %168 = vmatpush1.bf16.msra.mxu0 0
    %169 = vmatprep.mubr.bf16.mxu0 0
    %170 = vmatmul.mubr.bf16.gmra.mrb[0].mxu0 %v65
    %v171 = vpop.f32.mrb[0].mxu0
    %v172 = vadd.f32 %v87, %v171
    %v173 = vpop.f32.mrb[0].mxu0
    %v174 = vpop.f32.mrb[0].mxu0
    %v175 = vpop.f32.mrb[0].mxu0
    %176 = vdwg.mxu0
    %v177 = vmax.f32 %v172, 0.0
    %v178 = vpack.c.bf16 %v177, %v177
    %v179 = vld [vmem:[#allocation7] sm:$0xff]
    %v180 = vld [vmem:[#allocation7 + $0x8] sm:$0xff]
    %v181 = vld [vmem:[#allocation7 + $0x10] sm:$0xff]
    %v182 = vld [vmem:[#allocation7 + $0x18] sm:$0xff]
    %v183 = vld [vmem:[#allocation7 + $0x20] sm:$0xff]
    %v184 = vld [vmem:[#allocation7 + $0x28] sm:$0xff]
    %v185 = vld [vmem:[#allocation7 + $0x30] sm:$0xff]
    %v186 = vld [vmem:[#allocation7 + $0x38] sm:$0xff]
    %v187 = vld [vmem:[#allocation7 + $0x40] sm:$0xff]
    %v188 = vld [vmem:[#allocation7 + $0x48] sm:$0xff]
    %v189 = vld [vmem:[#allocation7 + $0x50] sm:$0xff]
    %v190 = vld [vmem:[#allocation7 + $0x58] sm:$0xff]
    %v191 = vld [vmem:[#allocation7 + $0x60] sm:$0xff]
    %v192 = vld [vmem:[#allocation7 + $0x68] sm:$0xff]
    %v193 = vld [vmem:[#allocation7 + $0x70] sm:$0xff]
    %v194 = vld [vmem:[#allocation7 + $0x78] sm:$0xff]
    %v195 = vld [vmem:[%s4] sm:$0x3]
    %v197 = vlaneseq
    %v198 = vshrl.u32 %v197, 7
    %v199 = vsub.s32 0, %v198
    %v200 = vrot.slane %v195, %v199
    %v201 = vlaneseq
    %v202 = vshrl.u32 %v201, 7
    %v203 = vsub.s32 1, %v202
    %v204 = vrot.slane %v195, %v203
    %v223 = vunpack.c.l.b16 %v179
    %v224 = vunpack.c.h.b16 %v179
    %v225 = vunpack.c.l.b16 %v180
    %v226 = vunpack.c.h.b16 %v180
    %v227 = vunpack.c.l.b16 %v181
    %v228 = vunpack.c.h.b16 %v181
    %v229 = vunpack.c.l.b16 %v182
    %v230 = vunpack.c.h.b16 %v182
    %v231 = vunpack.c.l.b16 %v183
    %v232 = vunpack.c.h.b16 %v183
    %v233 = vunpack.c.l.b16 %v184
    %v234 = vunpack.c.h.b16 %v184
    %v235 = vunpack.c.l.b16 %v185
    %v236 = vunpack.c.h.b16 %v185
    %v237 = vunpack.c.l.b16 %v186
    %v238 = vunpack.c.h.b16 %v186
    %v239 = vunpack.c.l.b16 %v187
    %v240 = vunpack.c.h.b16 %v187
    %v241 = vunpack.c.l.b16 %v188
    %v242 = vunpack.c.h.b16 %v188
    %v243 = vunpack.c.l.b16 %v189
    %v244 = vunpack.c.h.b16 %v189
    %v245 = vunpack.c.l.b16 %v190
    %v246 = vunpack.c.h.b16 %v190
    %v247 = vunpack.c.l.b16 %v191
    %v248 = vunpack.c.h.b16 %v191
    %v249 = vunpack.c.l.b16 %v192
    %v250 = vunpack.c.h.b16 %v192
    %v251 = vunpack.c.l.b16 %v193
    %v252 = vunpack.c.h.b16 %v193
    %v253 = vunpack.c.l.b16 %v194
    %v254 = vunpack.c.h.b16 %v194
    %v255 = vpack.c.b16 %v225, %v223
    %v256 = vpack.c.b16 %v226, %v224
    %v257 = vpack.c.b16 %v229, %v227
    %v258 = vpack.c.b16 %v230, %v228
    %v259 = vpack.c.b16 %v233, %v231
    %v260 = vpack.c.b16 %v234, %v232
    %v261 = vpack.c.b16 %v237, %v235
    %v262 = vpack.c.b16 %v238, %v236
    %v263 = vpack.c.b16 %v241, %v239
    %v264 = vpack.c.b16 %v242, %v240
    %v265 = vpack.c.b16 %v245, %v243
    %v266 = vpack.c.b16 %v246, %v244
    %v267 = vpack.c.b16 %v249, %v247
    %v268 = vpack.c.b16 %v250, %v248
    %v269 = vpack.c.b16 %v253, %v251
    %v270 = vpack.c.b16 %v254, %v252
    %287 = vmatprep.subr.bf16.mxu0 %v256
    %288 = vmatpush1.bf16.msra.mxu0 %v255
    %289 = vmatprep.subr.bf16.mxu0 %v258
    %290 = vmatpush1.bf16.msra.mxu0 %v257
    %291 = vmatprep.subr.bf16.mxu0 %v260
    %292 = vmatpush1.bf16.msra.mxu0 %v259
    %293 = vmatprep.subr.bf16.mxu0 %v262
    %294 = vmatpush1.bf16.msra.mxu0 %v261
    %295 = vmatprep.subr.bf16.mxu0 %v264
    %296 = vmatpush1.bf16.msra.mxu0 %v263
    %297 = vmatprep.subr.bf16.mxu0 %v266
    %298 = vmatpush1.bf16.msra.mxu0 %v265
    %299 = vmatprep.subr.bf16.mxu0 %v268
    %300 = vmatpush1.bf16.msra.mxu0 %v267
    %301 = vmatprep.subr.bf16.mxu0 %v270
    %302 = vmatpush1.bf16.msra.mxu0 %v269
    %303 = vmatprep.subr.bf16.mxu0 0
    %304 = vmatpush1.bf16.msra.mxu0 0
    %305 = vmatprep.subr.bf16.mxu0 0
    %306 = vmatpush1.bf16.msra.mxu0 0
    %307 = vmatprep.subr.bf16.mxu0 0
    %308 = vmatpush1.bf16.msra.mxu0 0
    %309 = vmatprep.subr.bf16.mxu0 0
    %310 = vmatpush1.bf16.msra.mxu0 0
    %311 = vmatprep.subr.bf16.mxu0 0
    %312 = vmatpush1.bf16.msra.mxu0 0
    %313 = vmatprep.subr.bf16.mxu0 0
    %314 = vmatpush1.bf16.msra.mxu0 0
    %315 = vmatprep.subr.bf16.mxu0 0
    %316 = vmatpush1.bf16.msra.mxu0 0
    %317 = vmatprep.subr.bf16.mxu0 0
    %318 = vmatpush1.bf16.msra.mxu0 0
    %319 = vmatprep.mubr.bf16.mxu0 0
    %320 = vmatmul.mubr.bf16.gmra.mrb[0].mxu0 %v178
    %v321 = vpop.f32.mrb[0].mxu0
    %v322 = vadd.f32 %v200, %v321
    %v323 = vpop.f32.mrb[0].mxu0
    %v324 = vadd.f32 %v204, %v323
    %v325 = vpop.f32.mrb[0].mxu0
    %v326 = vpop.f32.mrb[0].mxu0
    %327 = vdwg.mxu0
    %v328 = vadd.f32 %v322, 2.0
    %v329 = vxor.u32 %v328, 2147483648
    %v330 = vmul.f32 %v329, 1.442695
    %v331 = vpow.pop %v330
    %v332 = vadd.f32 %v331, 1.0
    %v333 = vrcp.pop %v332
    %v334 = vmul.f32 1.0, %v333
    %v335 = vadd.f32 %v334, 0.001
    %v336 = vmul.f32 %v335, %v64
    %v337 = vadd.f32 %v336, %v324
    %338 = vst [vmem:[#allocation8] sm:$0xff] %v337
    %v339 = vlaneseq
    %v340 = vand.u32 %v339, 127
    %vm341 = vcmp.lt.s32.totalorder %v340, 16
    %v342 = vlog2.pop %v335
    %v343 = vmul.f32 %v342, 0.6931472
    %v344 = vsel %vm341, 1, 0
    %vm345 = vcmp.eq.s32.totalorder %v344, 1
    %v346 = vsel %vm345, %v343, 0.0
    %347 = vadd.xlane.f32.xlu0 %v346
    %v348 = vpop.xlane.xlu0 %347
    %v350 = vlaneseq
    %v351 = vshrl.u32 %v350, 7
    %v352 = vsub.s32 %v340, %v351
    %v353 = vrot.slane %v348, %v352
    %vm355 = vcmask 57344
    %356 = vst.msk [vmem:[#allocation9] sm:$0x1] %vm355, %v353
    // Predicated region
    $region34: #{tpu_custom_call.1} parent=1 // pred_check
      _
    $region35: #{tpu_custom_call.1} parent=1 // pred_check_branch
      %358 = sbr.rel (0) target = $region37
    $region36: #{tpu_custom_call.1} parent=1 // pred_region
      %s360 = ssub.s32 128, 128
      %361 = vsyncadd [#allocation4], %s360
      %s363 = sshll.u32 [#allocation8], 4
      %s364 = int_to_ptr.vmem [resolvable:$true] %s363
      %366 = dma.vmem_to_hbm [thread:$0]  %s364, 128, %s5, [#allocation4]
    $region37: #{tpu_custom_call.1} parent=1 // pred_fallthru
      _
    // Predicated region
    $region38: #{tpu_custom_call.1} parent=1 // pred_check
      _
    $region39: #{tpu_custom_call.1} parent=1 // pred_check_branch
      %368 = sbr.rel (0) target = $region41
    $region40: #{tpu_custom_call.1} parent=1 // pred_region
      %s370 = ssub.s32 16, 16
      %371 = vsyncadd [#allocation10], %s370
      %s373 = sshll.u32 [#allocation9], 4
      %s374 = int_to_ptr.vmem [resolvable:$true] %s373
      %376 = dma.vmem_to_hbm [thread:$0]  %s374, 16, %s6, [#allocation10]
    $region41: #{tpu_custom_call.1} parent=1 // pred_fallthru
      _
    // Predicated region
    $region42: #{tpu_custom_call.1} parent=1 // pred_check
      _
    $region43: #{tpu_custom_call.1} parent=1 // pred_check_branch
      %378 = sbr.rel (0) target = $region45
    $region44: #{tpu_custom_call.1} parent=1 // pred_region
      %379 = dma.done [#allocation4], 128
    $region45: #{tpu_custom_call.1} parent=1 // pred_fallthru
      _
    // Predicated region
    $region46: #{tpu_custom_call.1} parent=1 // pred_check
      _
    $region47: #{tpu_custom_call.1} parent=1 // pred_check_branch
      %381 = sbr.rel (0) target = $region49
    $region48: #{tpu_custom_call.1} parent=1 // pred_region
      %382 = dma.done [#allocation10], 16
    $region49: #{tpu_custom_call.1} parent=1 // pred_fallthru
      _
    %383 = vsyncpa [#allocation3], 1
    %384 = vsyncpa [#allocation6], 1
    %385 = vsyncpa [#allocation4], 1
    %386 = vsyncpa [#allocation10], 1

</llo_original>
